<compile_context>
chip_gen: v7x
topology: tpu7x:2x2x1
jax: 0.10.0
libtpu: 0.0.40
codegen_flags: <defaults>
</compile_context>

<pallas_src>
import functools

import jax
import jax.numpy as jnp
from jax.experimental import pallas as pl
from jax.experimental.pallas import tpu as pltpu


def _round_up(x, m):
    return ((x + m - 1) // m) * m


# ---------------------------------------------------------------------------
# Pallas kernels
# ---------------------------------------------------------------------------

def _matmul_nok_kernel(a_ref, b_ref, bias_ref, o_ref, *, act):
    """Single full-depth K block: no accumulator scratch needed."""
    r = jnp.dot(a_ref[...], b_ref[...], preferred_element_type=jnp.float32)
    r = r + bias_ref[...]
    if act == "relu":
        r = jnp.maximum(r, 0.0)
    elif act == "tanh":
        r = jnp.tanh(r)
    o_ref[...] = r.astype(o_ref.dtype)


def _matmul_kernel(a_ref, b_ref, bias_ref, o_ref, acc_ref, *, act):
    """General K-split path (accumulate over the k grid axis)."""
    k = pl.program_id(2)

    @pl.when(k == 0)
    def _():
        acc_ref[...] = jnp.zeros_like(acc_ref)

    acc_ref[...] += jnp.dot(a_ref[...], b_ref[...],
                            preferred_element_type=jnp.float32)

    @pl.when(k == pl.num_programs(2) - 1)
    def _():
        r = acc_ref[...] + bias_ref[...]
        if act == "relu":
            r = jnp.maximum(r, 0.0)
        elif act == "tanh":
            r = jnp.tanh(r)
        o_ref[...] = r.astype(o_ref.dtype)


def matmul_bias_act(a, b, bias, act="none"):
    """act(a @ b + bias) with a:(M,K), b:(K,N), bias:(N,).  bf16 MXU inputs,
    f32 accumulation, tiles adapted to the true shapes."""
    M, K = a.shape
    Kb, N = b.shape
    assert K == Kb
    a = a.astype(jnp.bfloat16)
    b = b.astype(jnp.bfloat16)

    # ---- N (lane) tiling: use the true N when it is small so narrow layers
    #      (3-ch up0, 64-ch up1, z_dim heads) write only real columns.
    if N <= 128:
        tn, Np = N, N
    elif N % 256 == 0:
        tn, Np = 256, N
    elif N % 128 == 0:
        tn, Np = 128, N
    else:
        tn, Np = 128, _round_up(N, 128)

    # ---- K: single full-depth block (all K in this model are <= 4608), so the
    #      unaligned K values (147, 576, ...) are never padded/copied.
    if K <= 8192:
        tk, Kp = K, K
    else:
        tk = 2048
        Kp = _round_up(K, tk)

    # ---- M (sublane) tiling; keep the A tile <= ~4 MiB (bf16) per buffer.
    tm = min(1024, _round_up(M, 8))
    max_tm = max(8, ((4 << 20) // (2 * tk)) // 8 * 8)
    tm = min(tm, max_tm)
    Mp = _round_up(M, tm)

    if (Mp, Kp) != (M, K):
        a = jnp.pad(a, ((0, Mp - M), (0, Kp - K)))
    if (Kp, Np) != (K, N):
        b = jnp.pad(b, ((0, Kp - K), (0, Np - N)))
    bias2 = jnp.zeros((1, Np), jnp.float32).at[0, :N].set(bias.astype(jnp.float32))

    # VMEM budget from the tile arithmetic (double-buffered in/out + acc),
    # with a floor/cap that is safe on v5e/v6e (128 MiB) and v7x (64 MiB).
    est = 2 * (tm * tk * 2 + tk * tn * 2 + tm * max(tn, 128) * 4) \
        + tm * max(tn, 128) * 4 + 4 * 128 * 4
    vmem_limit = int(min(max(2 * est, 32 << 20), 48 << 20))

    if Kp == tk:
        out = pl.pallas_call(
            functools.partial(_matmul_nok_kernel, act=act),
            out_shape=jax.ShapeDtypeStruct((Mp, Np), jnp.float32),
            grid=(Mp // tm, Np // tn),
            in_specs=[pl.BlockSpec((tm, tk), lambda i, j: (i, 0)),
                      pl.BlockSpec((tk, tn), lambda i, j: (0, j)),
                      pl.BlockSpec((1, tn), lambda i, j: (0, j))],
            out_specs=pl.BlockSpec((tm, tn), lambda i, j: (i, j)),
            compiler_params=pltpu.CompilerParams(
                dimension_semantics=("parallel", "parallel"),
                vmem_limit_bytes=vmem_limit),
        )(a, b, bias2)
    else:
        out = pl.pallas_call(
            functools.partial(_matmul_kernel, act=act),
            out_shape=jax.ShapeDtypeStruct((Mp, Np), jnp.float32),
            grid=(Mp // tm, Np // tn, Kp // tk),
            in_specs=[pl.BlockSpec((tm, tk), lambda i, j, k: (i, k)),
                      pl.BlockSpec((tk, tn), lambda i, j, k: (k, j)),
                      pl.BlockSpec((1, tn), lambda i, j, k: (0, j))],
            out_specs=pl.BlockSpec((tm, tn), lambda i, j, k: (i, j)),
            scratch_shapes=[pltpu.VMEM((tm, tn), jnp.float32)],
            compiler_params=pltpu.CompilerParams(
                dimension_semantics=("parallel", "parallel", "arbitrary"),
                vmem_limit_bytes=vmem_limit),
        )(a, b, bias2)

    if (Mp, Np) != (M, N):
        out = out[:M, :N]
    return out


def _rows_blocking(R, br=1024):
    if R <= br:
        return R, R
    return _round_up(R, br), br


def _bn_stats_kernel(x_ref, s_ref, q_ref):
    x = x_ref[...]
    s_ref[0] = jnp.sum(x, axis=0, keepdims=True)
    q_ref[0] = jnp.sum(x * x, axis=0, keepdims=True)


def bn_stats(xr):
    """Per-channel sum / sum-of-squares: per-block partial sums on a parallel
    grid (works on both v7x TensorCores), tiny final reduce in XLA."""
    R, C = xr.shape
    Rp, br = _rows_blocking(R)
    if Rp != R:
        xr = jnp.pad(xr, ((0, Rp - R), (0, 0)))     # zero rows don't change sums
    nb = Rp // br
    s, q = pl.pallas_call(
        _bn_stats_kernel,
        out_shape=(jax.ShapeDtypeStruct((nb, 1, C), jnp.float32),
                   jax.ShapeDtypeStruct((nb, 1, C), jnp.float32)),
        grid=(nb,),
        in_specs=[pl.BlockSpec((br, C), lambda i: (i, 0))],
        out_specs=(pl.BlockSpec((1, 1, C), lambda i: (i, 0, 0)),
                   pl.BlockSpec((1, 1, C), lambda i: (i, 0, 0))),
        compiler_params=pltpu.CompilerParams(dimension_semantics=("parallel",)),
    )(xr)
    return jnp.sum(s, axis=(0, 1)), jnp.sum(q, axis=(0, 1))


def _scale_shift_kernel(x_ref, sc_ref, sh_ref, o_ref, *, act):
    y = x_ref[...] * sc_ref[...] + sh_ref[...]
    if act == "relu":
        y = jnp.maximum(y, 0.0)
    elif act == "tanh":
        y = jnp.tanh(y)
    o_ref[...] = y


def _scale_shift_res_kernel(x_ref, sc_ref, sh_ref, r_ref, o_ref, *, act):
    y = x_ref[...] * sc_ref[...] + sh_ref[...] + r_ref[...]
    if act == "relu":
        y = jnp.maximum(y, 0.0)
    o_ref[...] = y


def scale_shift_act(xr, scale, shift, act="none", residual=None):
    R, C = xr.shape
    Rp, br = _rows_blocking(R)
    if Rp != R:
        xr = jnp.pad(xr, ((0, Rp - R), (0, 0)))
        if residual is not None:
            residual = jnp.pad(residual, ((0, Rp - R), (0, 0)))
    sc = scale.reshape(1, C).astype(jnp.float32)
    sh = shift.reshape(1, C).astype(jnp.float32)
    row_spec = pl.BlockSpec((br, C), lambda i: (i, 0))
    vec_spec = pl.BlockSpec((1, C), lambda i: (0, 0))
    if residual is None:
        kern = functools.partial(_scale_shift_kernel, act=act)
        in_specs = [row_spec, vec_spec, vec_spec]
        args = (xr, sc, sh)
    else:
        kern = functools.partial(_scale_shift_res_kernel, act=act)
        in_specs = [row_spec, vec_spec, vec_spec, row_spec]
        args = (xr, sc, sh, residual)
    out = pl.pallas_call(
        kern,
        out_shape=jax.ShapeDtypeStruct((Rp, C), jnp.float32),
        grid=(Rp // br,),
        in_specs=in_specs,
        out_specs=row_spec,
        compiler_params=pltpu.CompilerParams(dimension_semantics=("parallel",)),
    )(*args)
    return out[:R] if Rp != R else out


def _max_stack_kernel(x_ref, o_ref, *, p):
    x = x_ref[...]
    m = x[0]
    for t in range(1, p):
        m = jnp.maximum(m, x[t])
    o_ref[...] = m


def maxpool2d_3x3_s2_p1(x):
    N, H, W, C = x.shape
    xp = jnp.pad(x, ((0, 0), (1, 1), (1, 1), (0, 0)), constant_values=-1e30)
    Hp, Wp = H + 2, W + 2
    Ho = (Hp - 3) // 2 + 1
    Wo = (Wp - 3) // 2 + 1
    cols = []
    for i in range(3):
        for j in range(3):
            cols.append(xp[:, i:i + Ho * 2:2, j:j + Wo * 2:2, :])
    R = N * Ho * Wo
    stacked = jnp.stack(cols, axis=0).reshape(9, R, C)
    Rp, br = _rows_blocking(R)
    if Rp != R:
        stacked = jnp.pad(stacked, ((0, 0), (0, Rp - R), (0, 0)))
    out = pl.pallas_call(
        functools.partial(_max_stack_kernel, p=9),
        out_shape=jax.ShapeDtypeStruct((Rp, C), jnp.float32),
        grid=(Rp // br,),
        in_specs=[pl.BlockSpec((9, br, C), lambda i: (0, i, 0))],
        out_specs=pl.BlockSpec((br, C), lambda i: (i, 0)),
        compiler_params=pltpu.CompilerParams(dimension_semantics=("parallel",)),
    )(stacked)
    out = out[:R] if Rp != R else out
    return out.reshape(N, Ho, Wo, C)


def _gap_kernel(x_ref, o_ref, *, hw):
    x = x_ref[...]
    acc = x[:, 0, :]
    for t in range(1, hw):
        acc = acc + x[:, t, :]
    o_ref[...] = acc * (1.0 / hw)


def global_avg_pool(x):
    N, H, W, C = x.shape
    hw = H * W
    xr = x.reshape(N, hw, C)
    return pl.pallas_call(
        functools.partial(_gap_kernel, hw=hw),
        out_shape=jax.ShapeDtypeStruct((N, C), jnp.float32),
        grid=(1,),
        in_specs=[pl.BlockSpec((N, hw, C), lambda i: (0, 0, 0))],
        out_specs=pl.BlockSpec((N, C), lambda i: (0, 0)),
    )(xr)


def _reparam_kernel(a_ref, d_ref, e_ref, z_ref):
    z_ref[...] = a_ref[...] + jnp.exp(d_ref[...] * 0.5) * e_ref[...]


def reparam(ave, log_dev, eps):
    N, Z = ave.shape
    return pl.pallas_call(
        _reparam_kernel,
        out_shape=jax.ShapeDtypeStruct((N, Z), jnp.float32),
        grid=(1,),
        in_specs=[pl.BlockSpec((N, Z), lambda i: (0, 0))] * 3,
        out_specs=pl.BlockSpec((N, Z), lambda i: (0, 0)),
    )(ave, log_dev, eps)


# ---------------------------------------------------------------------------
# Conv / ConvTranspose / BatchNorm built on the Pallas kernels
# ---------------------------------------------------------------------------

def _im2col(x, kh, kw, stride, pad):
    if pad:
        x = jnp.pad(x, ((0, 0), (pad, pad), (pad, pad), (0, 0)))
    N, H, W, C = x.shape
    Ho = (H - kh) // stride + 1
    Wo = (W - kw) // stride + 1
    cols = []
    for i in range(kh):
        for j in range(kw):
            cols.append(x[:, i:i + Ho * stride:stride, j:j + Wo * stride:stride, :])
    patches = jnp.stack(cols, axis=3)                 # (N, Ho, Wo, kh*kw, C)
    return patches.reshape(N * Ho * Wo, kh * kw * C), (N, Ho, Wo)


def conv2d(x, w, bias, stride, pad, act="none"):
    """x NHWC, w OIHW (PyTorch convention). im2col is built in bf16."""
    O, I, kh, kw = w.shape
    cols, (N, Ho, Wo) = _im2col(x.astype(jnp.bfloat16), kh, kw, stride, pad)
    wmat = jnp.transpose(w, (2, 3, 1, 0)).reshape(kh * kw * I, O)
    if bias is None:
        bias = jnp.zeros((O,), jnp.float32)
    out = matmul_bias_act(cols, wmat, bias, act=act)
    return out.reshape(N, Ho, Wo, O)


def _convT_4x4_s2_p1(x, w, bias, act):
    """Sub-pixel decomposition of ConvTranspose2d(k=4, s=2, p=1): four exact
    2x2 convs (one per output parity) over the un-dilated input -> no
    structural-zero FLOPs and 4x smaller im2col than the dilation lowering."""
    I, O, _, _ = w.shape
    N, H, W, C = x.shape
    xp = jnp.pad(x.astype(jnp.bfloat16), ((0, 0), (1, 1), (1, 1), (0, 0)))
    if bias is None:
        bias = jnp.zeros((O,), jnp.float32)
    rows = []
    for di in (0, 1):
        cols = []
        for dj in (0, 1):
            xs = xp[:, di:di + H + 1, dj:dj + W + 1, :]
            # phase kernel: w_phase[o, c, a, b] = w[c, o, 3-di-2a, 3-dj-2b]
            wp = jnp.transpose(w[:, :, 3 - di::-2, 3 - dj::-2], (1, 0, 2, 3))
            cols.append(conv2d(xs, wp, bias, stride=1, pad=0, act=act))
        rows.append(jnp.stack(cols, axis=3))          # (N, H, W, 2, O)
    y = jnp.stack(rows, axis=2)                       # (N, H, 2, W, 2, O)
    return y.reshape(N, 2 * H, 2 * W, O)


def conv_transpose2d(x, w, bias, stride, pad, act="none"):
    """x NHWC, w (I, O, kh, kw) (PyTorch ConvTranspose2d convention)."""
    I, O, kh, kw = w.shape
    if stride == 2 and kh == 4 and kw == 4 and pad == 1:
        return _convT_4x4_s2_p1(x, w, bias, act)
    # Fallback: zero-dilation lowering (unused by this model).
    N, H, W, C = x.shape
    if stride > 1:
        xd = jnp.zeros((N, (H - 1) * stride + 1, (W - 1) * stride + 1, C), x.dtype)
        xd = xd.at[:, ::stride, ::stride, :].set(x)
    else:
        xd = x
    w_conv = jnp.transpose(w[:, :, ::-1, ::-1], (1, 0, 2, 3))   # -> OIHW, flipped
    return conv2d(xd, w_conv, bias, stride=1, pad=kh - 1 - pad, act=act)


def batchnorm(x, gamma, beta, act="none", residual=None, eps=1e-5):
    """Training-mode BatchNorm2d (batch statistics, the nn.Module default);
    optional residual add fused into the scale/shift kernel."""
    N, H, W, C = x.shape
    xr = x.reshape(N * H * W, C)
    s, q = bn_stats(xr)
    R = float(N * H * W)
    mean = s / R
    var = q / R - mean * mean          # biased variance (PyTorch normalization)
    scale = gamma * jax.lax.rsqrt(var + eps)
    shift = beta - mean * scale
    res2 = residual.reshape(N * H * W, C) if residual is not None else None
    y = scale_shift_act(xr, scale, shift, act=act, residual=res2)
    return y.reshape(N, H, W, C)


# ---------------------------------------------------------------------------
# Model forward (ResNet18 encoder + decoder)
# ---------------------------------------------------------------------------

def basic_block(x, p):
    s = p["stride"]
    out = conv2d(x, p["conv1"], None, stride=s, pad=1)
    out = batchnorm(out, *p["bn1"], act="relu")
    out = conv2d(out, p["conv2"], None, stride=1, pad=1)
    if "down_conv" in p:
        idn = conv2d(x, p["down_conv"], None, stride=s, pad=0)
        idn = batchnorm(idn, *p["down_bn"], act="none")
    else:
        idn = x
    # bn2 + residual add + ReLU fused into one scale/shift kernel.
    return batchnorm(out, *p["bn2"], act="relu", residual=idn)


def encoder_forward(x, p, eps):
    h = conv2d(x, p["conv1"], None, stride=2, pad=3)
    h = batchnorm(h, *p["bn1"], act="relu")
    h = maxpool2d_3x3_s2_p1(h)
    for stage in p["stages"]:
        for bp in stage:
            h = basic_block(h, bp)
    feat = global_avg_pool(h)                               # (N, 512)
    ave = matmul_bias_act(feat, p["enc_ave"][0].T, p["enc_ave"][1])
    log_dev = matmul_bias_act(feat, p["enc_dev"][0].T, p["enc_dev"][1])
    z = reparam(ave, log_dev, eps)
    return z, ave, log_dev


def decoder_forward(z, p):
    W, b = p["reverse_flatten"]
    # The leading ReLU of up7 is fused into the linear's epilogue.
    h = matmul_bias_act(z, W.T, b, act="relu")
    h = h.reshape(z.shape[0], 1, 1, 512)
    # up7..up1: ConvTranspose -> BN; the next block's leading ReLU fused into BN.
    for name in ["up7", "up6", "up5", "up4", "up3", "up2", "up1"]:
        w, bias, gamma, beta = p[name]
        h = conv_transpose2d(h, w, bias, stride=2, pad=1)
        h = batchnorm(h, gamma, beta, act="relu")
    w, bias = p["up0"]
    h = conv_transpose2d(h, w, bias, stride=2, pad=1, act="tanh")
    return h


def vae_forward(x_nchw, params, eps):
    x = jnp.transpose(x_nchw, (0, 2, 3, 1)).astype(jnp.float32)   # NCHW -> NHWC
    z, _ave, _log_dev = encoder_forward(x, params["enc"], eps)
    y = decoder_forward(z, params["dec"])
    return z, jnp.transpose(y, (0, 3, 1, 2))                      # NHWC -> NCHW


# -------------------------- deterministic params ---------------------------

class KeyGen:
    def __init__(self, seed):
        self._key = jax.random.PRNGKey(seed)

    def __call__(self):
        self._key, k = jax.random.split(self._key)
        return k


def conv_init(kg, cout, cin, k):
    fan_in = float(cin * k * k)
    return jax.random.normal(kg(), (cout, cin, k, k), jnp.float32) / jnp.sqrt(fan_in)


def convT_init(kg, cin, cout, k):
    fan_in = float(cin * k * k)
    w = jax.random.normal(kg(), (cin, cout, k, k), jnp.float32) / jnp.sqrt(fan_in)
    b = 0.01 * jax.random.normal(kg(), (cout,), jnp.float32)
    return w, b


def linear_init(kg, cin, cout):
    w = jax.random.normal(kg(), (cout, cin), jnp.float32) / jnp.sqrt(float(cin))
    b = 0.01 * jax.random.normal(kg(), (cout,), jnp.float32)
    return w, b


def bn_init(c):
    return jnp.ones((c,), jnp.float32), jnp.zeros((c,), jnp.float32)


def make_params(z_dim, seed=42):
    kg = KeyGen(seed)
    enc = {"conv1": conv_init(kg, 64, 3, 7), "bn1": bn_init(64)}
    stages = []
    cin = 64
    for cout, stride in [(64, 1), (128, 2), (256, 2), (512, 2)]:
        blocks = []
        for bidx in range(2):
            s = stride if bidx == 0 else 1
            bp = {"stride": s,
                  "conv1": conv_init(kg, cout, cin, 3), "bn1": bn_init(cout),
                  "conv2": conv_init(kg, cout, cout, 3), "bn2": bn_init(cout)}
            if s != 1 or cin != cout:
                bp["down_conv"] = conv_init(kg, cout, cin, 1)
                bp["down_bn"] = bn_init(cout)
            blocks.append(bp)
            cin = cout
        stages.append(blocks)
    enc["stages"] = stages
    enc["enc_ave"] = linear_init(kg, 512, z_dim)
    enc["enc_dev"] = linear_init(kg, 512, z_dim)

    dec = {"reverse_flatten": linear_init(kg, z_dim, 512)}
    for name, ci, co in [("up7", 512, 512), ("up6", 512, 1024), ("up5", 1024, 512),
                         ("up4", 512, 512), ("up3", 512, 256), ("up2", 256, 128),
                         ("up1", 128, 64)]:
        w, b = convT_init(kg, ci, co, 4)
        g, be = bn_init(co)
        dec[name] = (w, b, g, be)
    dec["up0"] = convT_init(kg, 64, 3, 4)
    return {"enc": enc, "dec": dec}


if __name__ == "__main__":
    z_dim = 32
    key = jax.random.PRNGKey(0)
    k_x, k_eps = jax.random.split(key)
    # Small input: batch=2, 3x32x32 (resnet18 downsamples 32x -> 1x1 before avgpool).
    x = jax.random.normal(k_x, (2, 3, 32, 32), jnp.float32)
    # torch.randn_like(ave) replaced by a deterministic jax.random draw.
    eps = jax.random.normal(k_eps, (2, z_dim), jnp.float32)
    params = make_params(z_dim)

    z, x_rec = vae_forward(x, params, eps)
    jax.block_until_ready((z, x_rec))

    assert z.shape == (2, z_dim), z.shape
    assert x_rec.shape == (2, 3, 256, 256), x_rec.shape
    assert bool(jnp.all(jnp.isfinite(z))) and bool(jnp.all(jnp.isfinite(x_rec)))
    print("KERNEL_OK")
</pallas_src>

<mosaic_0001>
module attributes {stable_mosaic.version = 11 : i64} {
  func.func @_matmul_nok_kernel(%arg0: i32, %arg1: i32, %arg2: memref<512x147xbf16, #tpu.memory_space<vmem>>, %arg3: memref<147x64xbf16, #tpu.memory_space<vmem>>, %arg4: memref<1x64xf32, #tpu.memory_space<vmem>>, %arg5: memref<512x64xf32, #tpu.memory_space<vmem>>) attributes {dimension_semantics = [#tpu.dimension_semantics<parallel>, #tpu.dimension_semantics<parallel>], iteration_bounds = array<i64: 1, 1>, scalar_prefetch = 0 : i64, scratch_operands = 0 : i64, tpu.core_type = #tpu.core_type<tc>, window_params = [{transform_indices = @transform_0, window_bounds = array<i64: 512, 147>}, {transform_indices = @transform_1, window_bounds = array<i64: 147, 64>}, {transform_indices = @transform_2, window_bounds = array<i64: 1, 64>}, {transform_indices = @transform_3, window_bounds = array<i64: 512, 64>}]} {
    %c0 = arith.constant 0 : index
    %c0_0 = arith.constant 0 : index
    %0 = vector.load %arg2[%c0, %c0_0] : memref<512x147xbf16, #tpu.memory_space<vmem>>, vector<512x147xbf16>
    %c0_1 = arith.constant 0 : index
    %c0_2 = arith.constant 0 : index
    %1 = vector.load %arg3[%c0_1, %c0_2] : memref<147x64xbf16, #tpu.memory_space<vmem>>, vector<147x64xbf16>
    %cst = arith.constant dense<0.000000e+00> : vector<512x64xf32>
    %2 = tpu.matmul %0, %1, %cst {dimension_numbers = #tpu.dot_dimension_numbers<[1], [0], [0], [1], [0, 0, 1, 1], [], []>} : vector<512x147xbf16>, vector<147x64xbf16>, vector<512x64xf32> -> vector<512x64xf32>
    %c0_3 = arith.constant 0 : index
    %c0_4 = arith.constant 0 : index
    %3 = vector.load %arg4[%c0_3, %c0_4] : memref<1x64xf32, #tpu.memory_space<vmem>>, vector<1x64xf32>
    %4 = vector.broadcast %3 : vector<1x64xf32> to vector<512x64xf32>
    %5 = arith.addf %2, %4 : vector<512x64xf32>
    %c0_5 = arith.constant 0 : index
    %c0_6 = arith.constant 0 : index
    %6 = vector.load %arg5[%c0_5, %c0_6] : memref<512x64xf32, #tpu.memory_space<vmem>>, vector<512x64xf32>
    tpu.vector_store %arg5[%c0_5, %c0_6], %5 {strides = array<i32>} : memref<512x64xf32, #tpu.memory_space<vmem>>, vector<512x64xf32>,
    return
  }
  func.func @transform_0(%arg0: i32, %arg1: i32) -> (i32, i32) {
    %c0_i32 = arith.constant 0 : i32
    %c0_i32_0 = arith.constant 0 : i32
    return %arg0, %c0_i32 : i32, i32
  }
  func.func @transform_1(%arg0: i32, %arg1: i32) -> (i32, i32) {
    %c0_i32 = arith.constant 0 : i32
    %c0_i32_0 = arith.constant 0 : i32
    return %c0_i32, %arg1 : i32, i32
  }
  func.func @transform_2(%arg0: i32, %arg1: i32) -> (i32, i32) {
    %c0_i32 = arith.constant 0 : i32
    %c0_i32_0 = arith.constant 0 : i32
    return %c0_i32, %arg1 : i32, i32
  }
  func.func @transform_3(%arg0: i32, %arg1: i32) -> (i32, i32) {
    %c0_i32 = arith.constant 0 : i32
    return %arg0, %arg1 : i32, i32
  }
}

</mosaic_0001>

<llo_original>
// kernel: tpu_custom_call.1
$region0: #{tpu_custom_call.1}
  #allocation0 [shape = 'u32[]', space=smem, size = 0x4, offset = 0x4, fixed_abs, tag = 'smem constant byte address 0x4 - core index']
  #allocation1 [shape = 'u32[144,128]{1,0:T(1,128)}', space=vmem, size = 0x12000, scoped, tag = 'internal scratch']
  %s0 = inlined_call_operand.vmem [shape: bf16[512,147], index: 0, kind: input, shape index: {}]
  %s1 = inlined_call_operand.vmem [shape: bf16[147,64], index: 1, kind: input, shape index: {}]
  %s2 = inlined_call_operand.vmem [shape: f32[1,64], index: 2, kind: input, shape index: {}]
  %s3 = inlined_call_operand.vmem [shape: f32[512,64], index: 3, kind: output, shape index: {}]
  %s4 = sld [smem:[#allocation0]]
  $region22: #{tpu_custom_call.1} parent=0
    _
  %s6 = ssub.s32 1, %s4
  %s7 = scalar_select 0, %s6, %s4
  // Predicated region
  $region2: #{tpu_custom_call.1} parent=0 // pred_check
    _
  $region3: #{tpu_custom_call.1} parent=0 // pred_check_branch
    %9 = sbr.rel (0) target = $region5
  $region4: #{tpu_custom_call.1} parent=0 // pred_region
    _
  $region5: #{tpu_custom_call.1} parent=0 // pred_fallthru
    _
  // Predicated region
  $region6: #{tpu_custom_call.1} parent=0 // pred_check
    _
  $region7: #{tpu_custom_call.1} parent=0 // pred_check_branch
    %11 = sbr.rel (0) target = $region9
  $region8: #{tpu_custom_call.1} parent=0 // pred_region
    _
  $region9: #{tpu_custom_call.1} parent=0 // pred_fallthru
    _
  // Predicated region
  $region10: #{tpu_custom_call.1} parent=0 // pred_check
    _
  $region11: #{tpu_custom_call.1} parent=0 // pred_check_branch
    %13 = sbr.rel (0) target = $region13
  $region12: #{tpu_custom_call.1} parent=0 // pred_region
    _
  $region13: #{tpu_custom_call.1} parent=0 // pred_fallthru
    _
  %v15 = vld [vmem:[%s0] sm:$0xff]
  %v16 = vld [vmem:[%s0 + $0x8] sm:$0xff]
  %v17 = vld [vmem:[%s0 + $0x10] sm:$0xff]
  %v18 = vld [vmem:[%s0 + $0x18] sm:$0xff]
  %v19 = vld [vmem:[%s0 + $0x20] sm:$0xff]
  %v20 = vld [vmem:[%s0 + $0x28] sm:$0xff]
  %v21 = vld [vmem:[%s0 + $0x30] sm:$0xff]
  %v22 = vld [vmem:[%s0 + $0x38] sm:$0xff]
  %v23 = vld [vmem:[%s0 + $0x40] sm:$0xff]
  %v24 = vld [vmem:[%s0 + $0x48] sm:$0xff]
  %v25 = vld [vmem:[%s0 + $0x50] sm:$0xff]
  %v26 = vld [vmem:[%s0 + $0x58] sm:$0xff]
  %v27 = vld [vmem:[%s0 + $0x60] sm:$0xff]
  %v28 = vld [vmem:[%s0 + $0x68] sm:$0xff]
  %v29 = vld [vmem:[%s0 + $0x70] sm:$0xff]
  %v30 = vld [vmem:[%s0 + $0x78] sm:$0xff]
  %v31 = vld [vmem:[%s0 + $0x80] sm:$0xff]
  %v32 = vld [vmem:[%s0 + $0x88] sm:$0xff]
  %v33 = vld [vmem:[%s0 + $0x90] sm:$0xff]
  %v34 = vld [vmem:[%s0 + $0x98] sm:$0xff]
  %v35 = vld [vmem:[%s0 + $0xa0] sm:$0xff]
  %v36 = vld [vmem:[%s0 + $0xa8] sm:$0xff]
  %v37 = vld [vmem:[%s0 + $0xb0] sm:$0xff]
  %v38 = vld [vmem:[%s0 + $0xb8] sm:$0xff]
  %v39 = vld [vmem:[%s0 + $0xc0] sm:$0xff]
  %v40 = vld [vmem:[%s0 + $0xc8] sm:$0xff]
  %v41 = vld [vmem:[%s0 + $0xd0] sm:$0xff]
  %v42 = vld [vmem:[%s0 + $0xd8] sm:$0xff]
  %v43 = vld [vmem:[%s0 + $0xe0] sm:$0xff]
  %v44 = vld [vmem:[%s0 + $0xe8] sm:$0xff]
  %v45 = vld [vmem:[%s0 + $0xf0] sm:$0xff]
  %v46 = vld [vmem:[%s0 + $0xf8] sm:$0xff]
  %v47 = vld [vmem:[%s0 + $0x100] sm:$0xff]
  %v48 = vld [vmem:[%s0 + $0x108] sm:$0xff]
  %v49 = vld [vmem:[%s0 + $0x110] sm:$0xff]
  %v50 = vld [vmem:[%s0 + $0x118] sm:$0xff]
  %v51 = vld [vmem:[%s0 + $0x120] sm:$0xff]
  %v52 = vld [vmem:[%s0 + $0x128] sm:$0xff]
  %v53 = vld [vmem:[%s0 + $0x130] sm:$0xff]
  %v54 = vld [vmem:[%s0 + $0x138] sm:$0xff]
  %v55 = vld [vmem:[%s0 + $0x140] sm:$0xff]
  %v56 = vld [vmem:[%s0 + $0x148] sm:$0xff]
  %v57 = vld [vmem:[%s0 + $0x150] sm:$0xff]
  %v58 = vld [vmem:[%s0 + $0x158] sm:$0xff]
  %v59 = vld [vmem:[%s0 + $0x160] sm:$0xff]
  %v60 = vld [vmem:[%s0 + $0x168] sm:$0xff]
  %v61 = vld [vmem:[%s0 + $0x170] sm:$0xff]
  %v62 = vld [vmem:[%s0 + $0x178] sm:$0xff]
  %v63 = vld [vmem:[%s0 + $0x180] sm:$0xff]
  %v64 = vld [vmem:[%s0 + $0x188] sm:$0xff]
  %v65 = vld [vmem:[%s0 + $0x190] sm:$0xff]
  %v66 = vld [vmem:[%s0 + $0x198] sm:$0xff]
  %v67 = vld [vmem:[%s0 + $0x1a0] sm:$0xff]
  %v68 = vld [vmem:[%s0 + $0x1a8] sm:$0xff]
  %v69 = vld [vmem:[%s0 + $0x1b0] sm:$0xff]
  %v70 = vld [vmem:[%s0 + $0x1b8] sm:$0xff]
  %v71 = vld [vmem:[%s0 + $0x1c0] sm:$0xff]
  %v72 = vld [vmem:[%s0 + $0x1c8] sm:$0xff]
  %v73 = vld [vmem:[%s0 + $0x1d0] sm:$0xff]
  %v74 = vld [vmem:[%s0 + $0x1d8] sm:$0xff]
  %v75 = vld [vmem:[%s0 + $0x1e0] sm:$0xff]
  %v76 = vld [vmem:[%s0 + $0x1e8] sm:$0xff]
  %v77 = vld [vmem:[%s0 + $0x1f0] sm:$0xff]
  %v78 = vld [vmem:[%s0 + $0x1f8] sm:$0xff]
  %v79 = vld [vmem:[%s1] sm:$0xf]
  %v80 = vld [vmem:[%s1 + $0x4] sm:$0xf]
  %v81 = vld [vmem:[%s1 + $0x8] sm:$0xf]
  %v82 = vld [vmem:[%s1 + $0xc] sm:$0xf]
  %v83 = vld [vmem:[%s1 + $0x10] sm:$0xf]
  %v84 = vld [vmem:[%s1 + $0x14] sm:$0xf]
  %v85 = vld [vmem:[%s1 + $0x18] sm:$0xf]
  %v86 = vld [vmem:[%s1 + $0x1c] sm:$0xf]
  %v87 = vld [vmem:[%s1 + $0x20] sm:$0xf]
  %v88 = vld [vmem:[%s1 + $0x24] sm:$0xf]
  %v89 = vld [vmem:[%s1 + $0x28] sm:$0xf]
  %v90 = vld [vmem:[%s1 + $0x2c] sm:$0xf]
  %v91 = vld [vmem:[%s1 + $0x30] sm:$0xf]
  %v92 = vld [vmem:[%s1 + $0x34] sm:$0xf]
  %v93 = vld [vmem:[%s1 + $0x38] sm:$0xf]
  %v94 = vld [vmem:[%s1 + $0x3c] sm:$0xf]
  %v95 = vld [vmem:[%s1 + $0x40] sm:$0xf]
  %v96 = vld [vmem:[%s1 + $0x44] sm:$0xf]
  %v97 = vld [vmem:[%s1 + $0x48] sm:$0x3]
  %v98 = vld [vmem:[%s2] sm:$0x1]
  %v100 = vlaneseq
  %v101 = vshrl.u32 %v100, 7
  %v102 = vsub.s32 0, %v101
  %v103 = vrot.slane %v98, %v102
  %v169 = vunpack.c.l.b16 %v15
  %v170 = vunpack.c.h.b16 %v15
  %v171 = vunpack.c.l.b16 %v16
  %v172 = vunpack.c.h.b16 %v16
  %v173 = vunpack.c.l.b16 %v17
  %v174 = vunpack.c.h.b16 %v17
  %v175 = vunpack.c.l.b16 %v18
  %v176 = vunpack.c.h.b16 %v18
  %v177 = vunpack.c.l.b16 %v19
  %v178 = vunpack.c.h.b16 %v19
  %v179 = vunpack.c.l.b16 %v20
  %v180 = vunpack.c.h.b16 %v20
  %v181 = vunpack.c.l.b16 %v21
  %v182 = vunpack.c.h.b16 %v21
  %v183 = vunpack.c.l.b16 %v22
  %v184 = vunpack.c.h.b16 %v22
  %v185 = vunpack.c.l.b16 %v23
  %v186 = vunpack.c.h.b16 %v23
  %v187 = vunpack.c.l.b16 %v24
  %v188 = vunpack.c.h.b16 %v24
  %v189 = vunpack.c.l.b16 %v25
  %v190 = vunpack.c.h.b16 %v25
  %v191 = vunpack.c.l.b16 %v26
  %v192 = vunpack.c.h.b16 %v26
  %v193 = vunpack.c.l.b16 %v27
  %v194 = vunpack.c.h.b16 %v27
  %v195 = vunpack.c.l.b16 %v28
  %v196 = vunpack.c.h.b16 %v28
  %v197 = vunpack.c.l.b16 %v29
  %v198 = vunpack.c.h.b16 %v29
  %v199 = vunpack.c.l.b16 %v30
  %v200 = vunpack.c.h.b16 %v30
  %v201 = vunpack.c.l.b16 %v31
  %v202 = vunpack.c.h.b16 %v31
  %v203 = vunpack.c.l.b16 %v32
  %v204 = vunpack.c.h.b16 %v32
  %v205 = vunpack.c.l.b16 %v33
  %v206 = vunpack.c.h.b16 %v33
  %v207 = vunpack.c.l.b16 %v34
  %v208 = vunpack.c.h.b16 %v34
  %v209 = vunpack.c.l.b16 %v35
  %v210 = vunpack.c.h.b16 %v35
  %v211 = vunpack.c.l.b16 %v36
  %v212 = vunpack.c.h.b16 %v36
  %v213 = vunpack.c.l.b16 %v37
  %v214 = vunpack.c.h.b16 %v37
  %v215 = vunpack.c.l.b16 %v38
  %v216 = vunpack.c.h.b16 %v38
  %v217 = vunpack.c.l.b16 %v39
  %v218 = vunpack.c.h.b16 %v39
  %v219 = vunpack.c.l.b16 %v40
  %v220 = vunpack.c.h.b16 %v40
  %v221 = vunpack.c.l.b16 %v41
  %v222 = vunpack.c.h.b16 %v41
  %v223 = vunpack.c.l.b16 %v42
  %v224 = vunpack.c.h.b16 %v42
  %v225 = vunpack.c.l.b16 %v43
  %v226 = vunpack.c.h.b16 %v43
  %v227 = vunpack.c.l.b16 %v44
  %v228 = vunpack.c.h.b16 %v44
  %v229 = vunpack.c.l.b16 %v45
  %v230 = vunpack.c.h.b16 %v45
  %v231 = vunpack.c.l.b16 %v46
  %v232 = vunpack.c.h.b16 %v46
  %v233 = vunpack.c.l.b16 %v47
  %v234 = vunpack.c.h.b16 %v47
  %v235 = vunpack.c.l.b16 %v48
  %v236 = vunpack.c.h.b16 %v48
  %v237 = vunpack.c.l.b16 %v49
  %v238 = vunpack.c.h.b16 %v49
  %v239 = vunpack.c.l.b16 %v50
  %v240 = vunpack.c.h.b16 %v50
  %v241 = vunpack.c.l.b16 %v51
  %v242 = vunpack.c.h.b16 %v51
  %v243 = vunpack.c.l.b16 %v52
  %v244 = vunpack.c.h.b16 %v52
  %v245 = vunpack.c.l.b16 %v53
  %v246 = vunpack.c.h.b16 %v53
  %v247 = vunpack.c.l.b16 %v54
  %v248 = vunpack.c.h.b16 %v54
  %v249 = vunpack.c.l.b16 %v55
  %v250 = vunpack.c.h.b16 %v55
  %v251 = vunpack.c.l.b16 %v56
  %v252 = vunpack.c.h.b16 %v56
  %v253 = vunpack.c.l.b16 %v57
  %v254 = vunpack.c.h.b16 %v57
  %v255 = vunpack.c.l.b16 %v58
  %v256 = vunpack.c.h.b16 %v58
  %v257 = vunpack.c.l.b16 %v59
  %v258 = vunpack.c.h.b16 %v59
  %v259 = vunpack.c.l.b16 %v60
  %v260 = vunpack.c.h.b16 %v60
  %v261 = vunpack.c.l.b16 %v61
  %v262 = vunpack.c.h.b16 %v61
  %v263 = vunpack.c.l.b16 %v62
  %v264 = vunpack.c.h.b16 %v62
  %v265 = vunpack.c.l.b16 %v63
  %v266 = vunpack.c.h.b16 %v63
  %v267 = vunpack.c.l.b16 %v64
  %v268 = vunpack.c.h.b16 %v64
  %v269 = vunpack.c.l.b16 %v65
  %v270 = vunpack.c.h.b16 %v65
  %v271 = vunpack.c.l.b16 %v66
  %v272 = vunpack.c.h.b16 %v66
  %v273 = vunpack.c.l.b16 %v67
  %v274 = vunpack.c.h.b16 %v67
  %v275 = vunpack.c.l.b16 %v68
  %v276 = vunpack.c.h.b16 %v68
  %v277 = vunpack.c.l.b16 %v69
  %v278 = vunpack.c.h.b16 %v69
  %v279 = vunpack.c.l.b16 %v70
  %v280 = vunpack.c.h.b16 %v70
  %v281 = vunpack.c.l.b16 %v71
  %v282 = vunpack.c.h.b16 %v71
  %v283 = vunpack.c.l.b16 %v72
  %v284 = vunpack.c.h.b16 %v72
  %v285 = vunpack.c.l.b16 %v73
  %v286 = vunpack.c.h.b16 %v73
  %v287 = vunpack.c.l.b16 %v74
  %v288 = vunpack.c.h.b16 %v74
  %v289 = vunpack.c.l.b16 %v75
  %v290 = vunpack.c.h.b16 %v75
  %v291 = vunpack.c.l.b16 %v76
  %v292 = vunpack.c.h.b16 %v76
  %v293 = vunpack.c.l.b16 %v77
  %v294 = vunpack.c.h.b16 %v77
  %v295 = vunpack.c.l.b16 %v78
  %v296 = vunpack.c.h.b16 %v78
  %v297 = vpack.c.b16 %v171, %v169
  %v298 = vpack.c.b16 %v172, %v170
  %v299 = vpack.c.b16 %v175, %v173
  %v300 = vpack.c.b16 %v176, %v174
  %v301 = vpack.c.b16 %v179, %v177
  %v302 = vpack.c.b16 %v180, %v178
  %v303 = vpack.c.b16 %v183, %v181
  %v304 = vpack.c.b16 %v184, %v182
  %v305 = vpack.c.b16 %v187, %v185
  %v306 = vpack.c.b16 %v188, %v186
  %v307 = vpack.c.b16 %v191, %v189
  %v308 = vpack.c.b16 %v192, %v190
  %v309 = vpack.c.b16 %v195, %v193
  %v310 = vpack.c.b16 %v196, %v194
  %v311 = vpack.c.b16 %v199, %v197
  %v312 = vpack.c.b16 %v200, %v198
  %v313 = vpack.c.b16 %v203, %v201
  %v314 = vpack.c.b16 %v204, %v202
  %v315 = vpack.c.b16 %v207, %v205
  %v316 = vpack.c.b16 %v208, %v206
  %v317 = vpack.c.b16 %v211, %v209
  %v318 = vpack.c.b16 %v212, %v210
  %v319 = vpack.c.b16 %v215, %v213
  %v320 = vpack.c.b16 %v216, %v214
  %v321 = vpack.c.b16 %v219, %v217
  %v322 = vpack.c.b16 %v220, %v218
  %v323 = vpack.c.b16 %v223, %v221
  %v324 = vpack.c.b16 %v224, %v222
  %v325 = vpack.c.b16 %v227, %v225
  %v326 = vpack.c.b16 %v228, %v226
  %v327 = vpack.c.b16 %v231, %v229
  %v328 = vpack.c.b16 %v232, %v230
  %v329 = vpack.c.b16 %v235, %v233
  %v330 = vpack.c.b16 %v236, %v234
  %v331 = vpack.c.b16 %v239, %v237
  %v332 = vpack.c.b16 %v240, %v238
  %v333 = vpack.c.b16 %v243, %v241
  %v334 = vpack.c.b16 %v244, %v242
  %v335 = vpack.c.b16 %v247, %v245
  %v336 = vpack.c.b16 %v248, %v246
  %v337 = vpack.c.b16 %v251, %v249
  %v338 = vpack.c.b16 %v252, %v250
  %v339 = vpack.c.b16 %v255, %v253
  %v340 = vpack.c.b16 %v256, %v254
  %v341 = vpack.c.b16 %v259, %v257
  %v342 = vpack.c.b16 %v260, %v258
  %v343 = vpack.c.b16 %v263, %v261
  %v344 = vpack.c.b16 %v264, %v262
  %v345 = vpack.c.b16 %v267, %v265
  %v346 = vpack.c.b16 %v268, %v266
  %v347 = vpack.c.b16 %v271, %v269
  %v348 = vpack.c.b16 %v272, %v270
  %v349 = vpack.c.b16 %v275, %v273
  %v350 = vpack.c.b16 %v276, %v274
  %v351 = vpack.c.b16 %v279, %v277
  %v352 = vpack.c.b16 %v280, %v278
  %v353 = vpack.c.b16 %v283, %v281
  %v354 = vpack.c.b16 %v284, %v282
  %v355 = vpack.c.b16 %v287, %v285
  %v356 = vpack.c.b16 %v288, %v286
  %v357 = vpack.c.b16 %v291, %v289
  %v358 = vpack.c.b16 %v292, %v290
  %v359 = vpack.c.b16 %v295, %v293
  %v360 = vpack.c.b16 %v296, %v294
  %v412 = vunpack.c.l.b16 %v79
  %v413 = vunpack.c.l.b16 %v80
  %v414 = vunpack.c.l.b16 %v81
  %v415 = vunpack.c.l.b16 %v82
  %v416 = vunpack.c.l.b16 %v83
  %v417 = vunpack.c.l.b16 %v84
  %v418 = vunpack.c.l.b16 %v85
  %v419 = vunpack.c.l.b16 %v86
  %v420 = vunpack.c.l.b16 %v87
  %v421 = vunpack.c.l.b16 %v88
  %v422 = vunpack.c.l.b16 %v89
  %v423 = vunpack.c.l.b16 %v90
  %v424 = vunpack.c.l.b16 %v91
  %v425 = vunpack.c.l.b16 %v92
  %v426 = vunpack.c.l.b16 %v93
  %v427 = vunpack.c.l.b16 %v94
  %v428 = vunpack.c.l.b16 %v95
  %v429 = vunpack.c.l.b16 %v96
  %v430 = vunpack.c.l.b16 %v97
  %v431 = vpack.c.b16 %v413, %v412
  %v432 = vpack.c.b16 %v415, %v414
  %v433 = vpack.c.b16 %v417, %v416
  %v434 = vpack.c.b16 %v419, %v418
  %v435 = vpack.c.b16 %v421, %v420
  %v436 = vpack.c.b16 %v423, %v422
  %v437 = vpack.c.b16 %v425, %v424
  %v438 = vpack.c.b16 %v427, %v426
  %v439 = vpack.c.b16 %v429, %v428
  %v440 = vpack.c.b16 %v430, %v430
  %vm450 = vcmask 154624
  %v452 = vsel %vm450, %v298, 0
  %v455 = vsel %vm450, %v300, 0
  %v458 = vsel %vm450, %v302, 0
  %v461 = vsel %vm450, %v304, 0
  %v464 = vsel %vm450, %v306, 0
  %v467 = vsel %vm450, %v308, 0
  %v470 = vsel %vm450, %v310, 0
  %v473 = vsel %vm450, %v312, 0
  %v476 = vsel %vm450, %v314, 0
  %v479 = vsel %vm450, %v316, 0
  %v482 = vsel %vm450, %v318, 0
  %v485 = vsel %vm450, %v320, 0
  %v488 = vsel %vm450, %v322, 0
  %v491 = vsel %vm450, %v324, 0
  %v494 = vsel %vm450, %v326, 0
  %v497 = vsel %vm450, %v328, 0
  %v500 = vsel %vm450, %v330, 0
  %v503 = vsel %vm450, %v332, 0
  %v506 = vsel %vm450, %v334, 0
  %v509 = vsel %vm450, %v336, 0
  %v512 = vsel %vm450, %v338, 0
  %v515 = vsel %vm450, %v340, 0
  %v518 = vsel %vm450, %v342, 0
  %v521 = vsel %vm450, %v344, 0
  %v524 = vsel %vm450, %v346, 0
  %v527 = vsel %vm450, %v348, 0
  %v530 = vsel %vm450, %v350, 0
  %v533 = vsel %vm450, %v352, 0
  %v536 = vsel %vm450, %v354, 0
  %v539 = vsel %vm450, %v356, 0
  %v542 = vsel %vm450, %v358, 0
  %v545 = vsel %vm450, %v360, 0
  %vm547 = vcmask 1040384
  %vm548 = vcmask 1041408
  %v549 = vsel %vm547, 4294967295, 65535
  %v550 = vsel %vm548, %v549, 0
  %v552 = vand.u32 %v440, %v550
  %554 = vmatprep.subr.bf16.mxu0 0
  %555 = vmatpush1.bf16.msra.mxu0 %v431
  %556 = vmatprep.subr.bf16.mxu0 0
  %557 = vmatpush1.bf16.msra.mxu0 %v432
  %558 = vmatprep.subr.bf16.mxu0 0
  %559 = vmatpush1.bf16.msra.mxu0 %v433
  %560 = vmatprep.subr.bf16.mxu0 0
  %561 = vmatpush1.bf16.msra.mxu0 %v434
  %562 = vmatprep.subr.bf16.mxu0 0
  %563 = vmatpush1.bf16.msra.mxu0 %v435
  %564 = vmatprep.subr.bf16.mxu0 0
  %565 = vmatpush1.bf16.msra.mxu0 %v436
  %566 = vmatprep.subr.bf16.mxu0 0
  %567 = vmatpush1.bf16.msra.mxu0 %v437
  %568 = vmatprep.subr.bf16.mxu0 0
  %569 = vmatpush1.bf16.msra.mxu0 %v438
  %570 = vmatprep.subr.bf16.mxu0 0
  %571 = vmatpush1.bf16.msra.mxu0 %v439
  %572 = vmatprep.subr.bf16.mxu0 0
  %573 = vmatpush1.bf16.msra.mxu0 %v552
  %574 = vmatprep.subr.bf16.mxu0 0
  %575 = vmatpush1.bf16.msra.mxu0 0
  %576 = vmatprep.subr.bf16.mxu0 0
  %577 = vmatpush1.bf16.msra.mxu0 0
  %578 = vmatprep.subr.bf16.mxu0 0
  %579 = vmatpush1.bf16.msra.mxu0 0
  %580 = vmatprep.subr.bf16.mxu0 0
  %581 = vmatpush1.bf16.msra.mxu0 0
  %582 = vmatprep.subr.bf16.mxu0 0
  %583 = vmatpush1.bf16.msra.mxu0 0
  %584 = vmatprep.subr.bf16.mxu0 0
  %585 = vmatpush1.bf16.msra.mxu0 0
  %586 = vmatprep.mubr.bf16.mxu0 %v452
  %587 = vmatmul.mubr.bf16.gmra.mrb[0].mxu0 %v297
  %v588 = vpop.f32.mrb[0].mxu0
  %v589 = vadd.f32 %v103, %v588
  %v590 = vpop.f32.mrb[0].mxu0
  %v591 = vpop.f32.mrb[0].mxu0
  %v592 = vadd.f32 %v103, %v591
  %v593 = vpop.f32.mrb[0].mxu0
  %594 = vmatprep.mubr.bf16.mxu0 %v455
  %595 = vmatmul.mubr.bf16.gmra.mrb[0].mxu0 %v299
  %v596 = vpop.f32.mrb[0].mxu0
  %v597 = vadd.f32 %v103, %v596
  %v598 = vpop.f32.mrb[0].mxu0
  %v599 = vpop.f32.mrb[0].mxu0
  %v600 = vadd.f32 %v103, %v599
  %v601 = vpop.f32.mrb[0].mxu0
  %602 = vmatprep.mubr.bf16.mxu0 %v458
  %603 = vmatmul.mubr.bf16.gmra.mrb[0].mxu0 %v301
  %v604 = vpop.f32.mrb[0].mxu0
  %v605 = vadd.f32 %v103, %v604
  %v606 = vpop.f32.mrb[0].mxu0
  %v607 = vpop.f32.mrb[0].mxu0
  %v608 = vadd.f32 %v103, %v607
  %v609 = vpop.f32.mrb[0].mxu0
  %610 = vmatprep.mubr.bf16.mxu0 %v461
  %611 = vmatmul.mubr.bf16.gmra.mrb[0].mxu0 %v303
  %v612 = vpop.f32.mrb[0].mxu0
  %v613 = vadd.f32 %v103, %v612
  %v614 = vpop.f32.mrb[0].mxu0
  %v615 = vpop.f32.mrb[0].mxu0
  %v616 = vadd.f32 %v103, %v615
  %v617 = vpop.f32.mrb[0].mxu0
  %618 = vmatprep.mubr.bf16.mxu0 %v464
  %619 = vmatmul.mubr.bf16.gmra.mrb[0].mxu0 %v305
  %v620 = vpop.f32.mrb[0].mxu0
  %v621 = vadd.f32 %v103, %v620
  %v622 = vpop.f32.mrb[0].mxu0
  %v623 = vpop.f32.mrb[0].mxu0
  %v624 = vadd.f32 %v103, %v623
  %v625 = vpop.f32.mrb[0].mxu0
  %626 = vmatprep.mubr.bf16.mxu0 %v467
  %627 = vmatmul.mubr.bf16.gmra.mrb[0].mxu0 %v307
  %v628 = vpop.f32.mrb[0].mxu0
  %v629 = vadd.f32 %v103, %v628
  %v630 = vpop.f32.mrb[0].mxu0
  %v631 = vpop.f32.mrb[0].mxu0
  %v632 = vadd.f32 %v103, %v631
  %v633 = vpop.f32.mrb[0].mxu0
  %634 = vmatprep.mubr.bf16.mxu0 %v470
  %635 = vmatmul.mubr.bf16.gmra.mrb[0].mxu0 %v309
  %v636 = vpop.f32.mrb[0].mxu0
  %v637 = vadd.f32 %v103, %v636
  %v638 = vpop.f32.mrb[0].mxu0
  %v639 = vpop.f32.mrb[0].mxu0
  %v640 = vadd.f32 %v103, %v639
  %v641 = vpop.f32.mrb[0].mxu0
  %642 = vmatprep.mubr.bf16.mxu0 %v473
  %643 = vmatmul.mubr.bf16.gmra.mrb[0].mxu0 %v311
  %v644 = vpop.f32.mrb[0].mxu0
  %v645 = vadd.f32 %v103, %v644
  %v646 = vpop.f32.mrb[0].mxu0
  %v647 = vpop.f32.mrb[0].mxu0
  %v648 = vadd.f32 %v103, %v647
  %v649 = vpop.f32.mrb[0].mxu0
  %650 = vmatprep.mubr.bf16.mxu0 %v476
  %651 = vmatmul.mubr.bf16.gmra.mrb[0].mxu0 %v313
  %v652 = vpop.f32.mrb[0].mxu0
  %v653 = vadd.f32 %v103, %v652
  %v654 = vpop.f32.mrb[0].mxu0
  %v655 = vpop.f32.mrb[0].mxu0
  %v656 = vadd.f32 %v103, %v655
  %v657 = vpop.f32.mrb[0].mxu0
  %658 = vmatprep.mubr.bf16.mxu0 %v479
  %659 = vmatmul.mubr.bf16.gmra.mrb[0].mxu0 %v315
  %v660 = vpop.f32.mrb[0].mxu0
  %v661 = vadd.f32 %v103, %v660
  %v662 = vpop.f32.mrb[0].mxu0
  %v663 = vpop.f32.mrb[0].mxu0
  %v664 = vadd.f32 %v103, %v663
  %v665 = vpop.f32.mrb[0].mxu0
  %666 = vmatprep.mubr.bf16.mxu0 %v482
  %667 = vmatmul.mubr.bf16.gmra.mrb[0].mxu0 %v317
  %v668 = vpop.f32.mrb[0].mxu0
  %v669 = vadd.f32 %v103, %v668
  %v670 = vpop.f32.mrb[0].mxu0
  %v671 = vpop.f32.mrb[0].mxu0
  %v672 = vadd.f32 %v103, %v671
  %v673 = vpop.f32.mrb[0].mxu0
  %674 = vmatprep.mubr.bf16.mxu0 %v485
  %675 = vmatmul.mubr.bf16.gmra.mrb[0].mxu0 %v319
  %v676 = vpop.f32.mrb[0].mxu0
  %v677 = vadd.f32 %v103, %v676
  %v678 = vpop.f32.mrb[0].mxu0
  %v679 = vpop.f32.mrb[0].mxu0
  %v680 = vadd.f32 %v103, %v679
  %v681 = vpop.f32.mrb[0].mxu0
  %682 = vmatprep.mubr.bf16.mxu0 %v488
  %683 = vmatmul.mubr.bf16.gmra.mrb[0].mxu0 %v321
  %v684 = vpop.f32.mrb[0].mxu0
  %v685 = vadd.f32 %v103, %v684
  %v686 = vpop.f32.mrb[0].mxu0
  %v687 = vpop.f32.mrb[0].mxu0
  %v688 = vadd.f32 %v103, %v687
  %v689 = vpop.f32.mrb[0].mxu0
  %690 = vmatprep.mubr.bf16.mxu0 %v491
  %691 = vmatmul.mubr.bf16.gmra.mrb[0].mxu0 %v323
  %v692 = vpop.f32.mrb[0].mxu0
  %v693 = vadd.f32 %v103, %v692
  %v694 = vpop.f32.mrb[0].mxu0
  %v695 = vpop.f32.mrb[0].mxu0
  %v696 = vadd.f32 %v103, %v695
  %v697 = vpop.f32.mrb[0].mxu0
  %698 = vmatprep.mubr.bf16.mxu0 %v494
  %699 = vmatmul.mubr.bf16.gmra.mrb[0].mxu0 %v325
  %v700 = vpop.f32.mrb[0].mxu0
  %v701 = vadd.f32 %v103, %v700
  %v702 = vpop.f32.mrb[0].mxu0
  %v703 = vpop.f32.mrb[0].mxu0
  %v704 = vadd.f32 %v103, %v703
  %v705 = vpop.f32.mrb[0].mxu0
  %706 = vmatprep.mubr.bf16.mxu0 %v497
  %707 = vmatmul.mubr.bf16.gmra.mrb[0].mxu0 %v327
  %v708 = vpop.f32.mrb[0].mxu0
  %v709 = vadd.f32 %v103, %v708
  %v710 = vpop.f32.mrb[0].mxu0
  %v711 = vpop.f32.mrb[0].mxu0
  %v712 = vadd.f32 %v103, %v711
  %v713 = vpop.f32.mrb[0].mxu0
  %714 = vmatprep.mubr.bf16.mxu0 %v500
  %715 = vmatmul.mubr.bf16.gmra.mrb[0].mxu0 %v329
  %v716 = vpop.f32.mrb[0].mxu0
  %v717 = vadd.f32 %v103, %v716
  %v718 = vpop.f32.mrb[0].mxu0
  %v719 = vpop.f32.mrb[0].mxu0
  %v720 = vadd.f32 %v103, %v719
  %v721 = vpop.f32.mrb[0].mxu0
  %722 = vmatprep.mubr.bf16.mxu0 %v503
  %723 = vmatmul.mubr.bf16.gmra.mrb[0].mxu0 %v331
  %v724 = vpop.f32.mrb[0].mxu0
  %v725 = vadd.f32 %v103, %v724
  %v726 = vpop.f32.mrb[0].mxu0
  %v727 = vpop.f32.mrb[0].mxu0
  %v728 = vadd.f32 %v103, %v727
  %v729 = vpop.f32.mrb[0].mxu0
  %730 = vmatprep.mubr.bf16.mxu0 %v506
  %731 = vmatmul.mubr.bf16.gmra.mrb[0].mxu0 %v333
  %v732 = vpop.f32.mrb[0].mxu0
  %v733 = vadd.f32 %v103, %v732
  %v734 = vpop.f32.mrb[0].mxu0
  %v735 = vpop.f32.mrb[0].mxu0
  %v736 = vadd.f32 %v103, %v735
  %v737 = vpop.f32.mrb[0].mxu0
  %738 = vmatprep.mubr.bf16.mxu0 %v509
  %739 = vmatmul.mubr.bf16.gmra.mrb[0].mxu0 %v335
  %v740 = vpop.f32.mrb[0].mxu0
  %v741 = vadd.f32 %v103, %v740
  %v742 = vpop.f32.mrb[0].mxu0
  %v743 = vpop.f32.mrb[0].mxu0
  %v744 = vadd.f32 %v103, %v743
  %v745 = vpop.f32.mrb[0].mxu0
  %746 = vmatprep.mubr.bf16.mxu0 %v512
  %747 = vmatmul.mubr.bf16.gmra.mrb[0].mxu0 %v337
  %v748 = vpop.f32.mrb[0].mxu0
  %v749 = vadd.f32 %v103, %v748
  %v750 = vpop.f32.mrb[0].mxu0
  %v751 = vpop.f32.mrb[0].mxu0
  %v752 = vadd.f32 %v103, %v751
  %v753 = vpop.f32.mrb[0].mxu0
  %754 = vmatprep.mubr.bf16.mxu0 %v515
  %755 = vmatmul.mubr.bf16.gmra.mrb[0].mxu0 %v339
  %v756 = vpop.f32.mrb[0].mxu0
  %v757 = vadd.f32 %v103, %v756
  %v758 = vpop.f32.mrb[0].mxu0
  %v759 = vpop.f32.mrb[0].mxu0
  %v760 = vadd.f32 %v103, %v759
  %v761 = vpop.f32.mrb[0].mxu0
  %762 = vmatprep.mubr.bf16.mxu0 %v518
  %763 = vmatmul.mubr.bf16.gmra.mrb[0].mxu0 %v341
  %v764 = vpop.f32.mrb[0].mxu0
  %v765 = vadd.f32 %v103, %v764
  %v766 = vpop.f32.mrb[0].mxu0
  %v767 = vpop.f32.mrb[0].mxu0
  %v768 = vadd.f32 %v103, %v767
  %v769 = vpop.f32.mrb[0].mxu0
  %770 = vmatprep.mubr.bf16.mxu0 %v521
  %771 = vmatmul.mubr.bf16.gmra.mrb[0].mxu0 %v343
  %v772 = vpop.f32.mrb[0].mxu0
  %v773 = vadd.f32 %v103, %v772
  %v774 = vpop.f32.mrb[0].mxu0
  %v775 = vpop.f32.mrb[0].mxu0
  %v776 = vadd.f32 %v103, %v775
  %v777 = vpop.f32.mrb[0].mxu0
  %778 = vmatprep.mubr.bf16.mxu0 %v524
  %779 = vmatmul.mubr.bf16.gmra.mrb[0].mxu0 %v345
  %v780 = vpop.f32.mrb[0].mxu0
  %v781 = vadd.f32 %v103, %v780
  %v782 = vpop.f32.mrb[0].mxu0
  %v783 = vpop.f32.mrb[0].mxu0
  %v784 = vadd.f32 %v103, %v783
  %v785 = vpop.f32.mrb[0].mxu0
  %786 = vmatprep.mubr.bf16.mxu0 %v527
  %787 = vmatmul.mubr.bf16.gmra.mrb[0].mxu0 %v347
  %v788 = vpop.f32.mrb[0].mxu0
  %v789 = vadd.f32 %v103, %v788
  %v790 = vpop.f32.mrb[0].mxu0
  %v791 = vpop.f32.mrb[0].mxu0
  %v792 = vadd.f32 %v103, %v791
  %v793 = vpop.f32.mrb[0].mxu0
  %794 = vmatprep.mubr.bf16.mxu0 %v530
  %795 = vmatmul.mubr.bf16.gmra.mrb[0].mxu0 %v349
  %v796 = vpop.f32.mrb[0].mxu0
  %v797 = vadd.f32 %v103, %v796
  %v798 = vpop.f32.mrb[0].mxu0
  %v799 = vpop.f32.mrb[0].mxu0
  %v800 = vadd.f32 %v103, %v799
  %v801 = vpop.f32.mrb[0].mxu0
  %802 = vmatprep.mubr.bf16.mxu0 %v533
  %803 = vmatmul.mubr.bf16.gmra.mrb[0].mxu0 %v351
  %v804 = vpop.f32.mrb[0].mxu0
  %v805 = vadd.f32 %v103, %v804
  %v806 = vpop.f32.mrb[0].mxu0
  %v807 = vpop.f32.mrb[0].mxu0
  %v808 = vadd.f32 %v103, %v807
  %v809 = vpop.f32.mrb[0].mxu0
  %810 = vmatprep.mubr.bf16.mxu0 %v536
  %811 = vmatmul.mubr.bf16.gmra.mrb[0].mxu0 %v353
  %v812 = vpop.f32.mrb[0].mxu0
  %v813 = vadd.f32 %v103, %v812
  %v814 = vpop.f32.mrb[0].mxu0
  %v815 = vpop.f32.mrb[0].mxu0
  %v816 = vadd.f32 %v103, %v815
  %v817 = vpop.f32.mrb[0].mxu0
  %818 = vmatprep.mubr.bf16.mxu0 %v539
  %819 = vmatmul.mubr.bf16.gmra.mrb[0].mxu0 %v355
  %v820 = vpop.f32.mrb[0].mxu0
  %v821 = vadd.f32 %v103, %v820
  %v822 = vpop.f32.mrb[0].mxu0
  %v823 = vpop.f32.mrb[0].mxu0
  %v824 = vadd.f32 %v103, %v823
  %v825 = vpop.f32.mrb[0].mxu0
  %826 = vmatprep.mubr.bf16.mxu0 %v542
  %827 = vmatmul.mubr.bf16.gmra.mrb[0].mxu0 %v357
  %v828 = vpop.f32.mrb[0].mxu0
  %v829 = vadd.f32 %v103, %v828
  %v830 = vpop.f32.mrb[0].mxu0
  %v831 = vpop.f32.mrb[0].mxu0
  %v832 = vadd.f32 %v103, %v831
  %v833 = vpop.f32.mrb[0].mxu0
  %834 = vmatprep.mubr.bf16.mxu0 %v545
  %835 = vmatmul.mubr.bf16.gmra.mrb[0].mxu0 %v359
  %v836 = vpop.f32.mrb[0].mxu0
  %v837 = vadd.f32 %v103, %v836
  %v838 = vpop.f32.mrb[0].mxu0
  %v839 = vpop.f32.mrb[0].mxu0
  %v840 = vadd.f32 %v103, %v839
  %v841 = vpop.f32.mrb[0].mxu0
  %842 = vdwg.mxu0
  %vm843 = vcmask 523264
  %844 = vst.msk [vmem:[%s3] sm:$0xff] %vm843, %v589
  %845 = vst.msk [vmem:[%s3 + $0x8] sm:$0xff] %vm843, %v592
  %846 = vst.msk [vmem:[%s3 + $0x10] sm:$0xff] %vm843, %v597
  %847 = vst.msk [vmem:[%s3 + $0x18] sm:$0xff] %vm843, %v600
  %848 = vst.msk [vmem:[%s3 + $0x20] sm:$0xff] %vm843, %v605
  %849 = vst.msk [vmem:[%s3 + $0x28] sm:$0xff] %vm843, %v608
  %850 = vst.msk [vmem:[%s3 + $0x30] sm:$0xff] %vm843, %v613
  %851 = vst.msk [vmem:[%s3 + $0x38] sm:$0xff] %vm843, %v616
  %852 = vst.msk [vmem:[%s3 + $0x40] sm:$0xff] %vm843, %v621
  %853 = vst.msk [vmem:[%s3 + $0x48] sm:$0xff] %vm843, %v624
  %854 = vst.msk [vmem:[%s3 + $0x50] sm:$0xff] %vm843, %v629
  %855 = vst.msk [vmem:[%s3 + $0x58] sm:$0xff] %vm843, %v632
  %856 = vst.msk [vmem:[%s3 + $0x60] sm:$0xff] %vm843, %v637
  %857 = vst.msk [vmem:[%s3 + $0x68] sm:$0xff] %vm843, %v640
  %858 = vst.msk [vmem:[%s3 + $0x70] sm:$0xff] %vm843, %v645
  %859 = vst.msk [vmem:[%s3 + $0x78] sm:$0xff] %vm843, %v648
  %860 = vst.msk [vmem:[%s3 + $0x80] sm:$0xff] %vm843, %v653
  %861 = vst.msk [vmem:[%s3 + $0x88] sm:$0xff] %vm843, %v656
  %862 = vst.msk [vmem:[%s3 + $0x90] sm:$0xff] %vm843, %v661
  %863 = vst.msk [vmem:[%s3 + $0x98] sm:$0xff] %vm843, %v664
  %864 = vst.msk [vmem:[%s3 + $0xa0] sm:$0xff] %vm843, %v669
  %865 = vst.msk [vmem:[%s3 + $0xa8] sm:$0xff] %vm843, %v672
  %866 = vst.msk [vmem:[%s3 + $0xb0] sm:$0xff] %vm843, %v677
  %867 = vst.msk [vmem:[%s3 + $0xb8] sm:$0xff] %vm843, %v680
  %868 = vst.msk [vmem:[%s3 + $0xc0] sm:$0xff] %vm843, %v685
  %869 = vst.msk [vmem:[%s3 + $0xc8] sm:$0xff] %vm843, %v688
  %870 = vst.msk [vmem:[%s3 + $0xd0] sm:$0xff] %vm843, %v693
  %871 = vst.msk [vmem:[%s3 + $0xd8] sm:$0xff] %vm843, %v696
  %872 = vst.msk [vmem:[%s3 + $0xe0] sm:$0xff] %vm843, %v701
  %873 = vst.msk [vmem:[%s3 + $0xe8] sm:$0xff] %vm843, %v704
  %874 = vst.msk [vmem:[%s3 + $0xf0] sm:$0xff] %vm843, %v709
  %875 = vst.msk [vmem:[%s3 + $0xf8] sm:$0xff] %vm843, %v712
  %876 = vst.msk [vmem:[%s3 + $0x100] sm:$0xff] %vm843, %v717
  %877 = vst.msk [vmem:[%s3 + $0x108] sm:$0xff] %vm843, %v720
  %878 = vst.msk [vmem:[%s3 + $0x110] sm:$0xff] %vm843, %v725
  %879 = vst.msk [vmem:[%s3 + $0x118] sm:$0xff] %vm843, %v728
  %880 = vst.msk [vmem:[%s3 + $0x120] sm:$0xff] %vm843, %v733
  %881 = vst.msk [vmem:[%s3 + $0x128] sm:$0xff] %vm843, %v736
  %882 = vst.msk [vmem:[%s3 + $0x130] sm:$0xff] %vm843, %v741
  %883 = vst.msk [vmem:[%s3 + $0x138] sm:$0xff] %vm843, %v744
  %884 = vst.msk [vmem:[%s3 + $0x140] sm:$0xff] %vm843, %v749
  %885 = vst.msk [vmem:[%s3 + $0x148] sm:$0xff] %vm843, %v752
  %886 = vst.msk [vmem:[%s3 + $0x150] sm:$0xff] %vm843, %v757
  %887 = vst.msk [vmem:[%s3 + $0x158] sm:$0xff] %vm843, %v760
  %888 = vst.msk [vmem:[%s3 + $0x160] sm:$0xff] %vm843, %v765
  %889 = vst.msk [vmem:[%s3 + $0x168] sm:$0xff] %vm843, %v768
  %890 = vst.msk [vmem:[%s3 + $0x170] sm:$0xff] %vm843, %v773
  %891 = vst.msk [vmem:[%s3 + $0x178] sm:$0xff] %vm843, %v776
  %892 = vst.msk [vmem:[%s3 + $0x180] sm:$0xff] %vm843, %v781
  %893 = vst.msk [vmem:[%s3 + $0x188] sm:$0xff] %vm843, %v784
  %894 = vst.msk [vmem:[%s3 + $0x190] sm:$0xff] %vm843, %v789
  %895 = vst.msk [vmem:[%s3 + $0x198] sm:$0xff] %vm843, %v792
  %896 = vst.msk [vmem:[%s3 + $0x1a0] sm:$0xff] %vm843, %v797
  %897 = vst.msk [vmem:[%s3 + $0x1a8] sm:$0xff] %vm843, %v800
  %898 = vst.msk [vmem:[%s3 + $0x1b0] sm:$0xff] %vm843, %v805
  %899 = vst.msk [vmem:[%s3 + $0x1b8] sm:$0xff] %vm843, %v808
  %900 = vst.msk [vmem:[%s3 + $0x1c0] sm:$0xff] %vm843, %v813
  %901 = vst.msk [vmem:[%s3 + $0x1c8] sm:$0xff] %vm843, %v816
  %902 = vst.msk [vmem:[%s3 + $0x1d0] sm:$0xff] %vm843, %v821
  %903 = vst.msk [vmem:[%s3 + $0x1d8] sm:$0xff] %vm843, %v824
  %904 = vst.msk [vmem:[%s3 + $0x1e0] sm:$0xff] %vm843, %v829
  %905 = vst.msk [vmem:[%s3 + $0x1e8] sm:$0xff] %vm843, %v832
  %906 = vst.msk [vmem:[%s3 + $0x1f0] sm:$0xff] %vm843, %v837
  %907 = vst.msk [vmem:[%s3 + $0x1f8] sm:$0xff] %vm843, %v840
  // Predicated region
  $region14: #{tpu_custom_call.1} parent=0 // pred_check
    _
  $region15: #{tpu_custom_call.1} parent=0 // pred_check_branch
    %909 = sbr.rel (0) target = $region17
  $region16: #{tpu_custom_call.1} parent=0 // pred_region
    _
  $region17: #{tpu_custom_call.1} parent=0 // pred_fallthru
    _
  // Predicated region
  $region18: #{tpu_custom_call.1} parent=0 // pred_check
    _
  $region19: #{tpu_custom_call.1} parent=0 // pred_check_branch
    %911 = sbr.rel (0) target = $region21
  $region20: #{tpu_custom_call.1} parent=0 // pred_region
    _
  $region21: #{tpu_custom_call.1} parent=0 // pred_fallthru
    _

</llo_original>
